<compile_context>
chip_gen: v7x
topology: tpu7x:2x2x1
jax: 0.10.0
libtpu: 0.0.40
codegen_flags: <defaults>
</compile_context>

<pallas_src>
import functools

import jax
import jax.numpy as jnp
from jax import lax
from jax.experimental import pallas as pl
from jax.experimental.pallas import tpu as pltpu


def _ce_kernel(logits_ref, tgt_ref, out_ref, acc_ref, cls_ref, *, hw, tile_hw):
    t = pl.program_id(1)

    @pl.when(t == 0)
    def _():
        acc_ref[...] = jnp.zeros_like(acc_ref)
        cls_ref[...] = lax.broadcasted_iota(jnp.int32, cls_ref.shape, 0)

    logits = logits_ref[...].astype(jnp.float32)            # (C, tile_hw)
    tgt = tgt_ref[...]                                       # (1, tile_hw) int32

    # numerically-stable log-sum-exp over the class (sublane) axis
    m = jnp.max(logits, axis=0, keepdims=True)               # (1, tile_hw)
    lse = jnp.log(jnp.sum(jnp.exp(logits - m), axis=0, keepdims=True)) + m

    # pick the target-class logit via one-hot select (gather-free on TPU)
    picked = jnp.sum(jnp.where(cls_ref[...] == tgt, logits, 0.0),
                     axis=0, keepdims=True)                  # (1, tile_hw)

    # mask ragged-tail columns (grid over-covers H*W) and any negative targets
    col = t * tile_hw + lax.broadcasted_iota(jnp.int32, tgt.shape, 1)
    valid = (col < hw) & (tgt >= 0)
    acc_ref[...] += jnp.where(valid, lse - picked, 0.0)      # pure VPU add

    @pl.when(t == pl.num_programs(1) - 1)
    def _():
        out_ref[...] = jnp.sum(acc_ref[...]).reshape(1, 1)   # single epilogue reduce


def _pick_tile_hw(C, HW, itemsize, *, budget_bytes=2 << 20, cap=8192):
    """Largest lane-dense (multiple-of-128) H*W tile within a per-buffer VMEM budget."""
    by_budget = (budget_bytes // max(1, C * itemsize)) // 128 * 128
    tile = max(128, min(cap, by_budget))
    if HW <= tile:
        return HW          # full extent: legal regardless of the 128 rule, no ragged tail
    return tile


def cross_entropy_loss_2d(inputs, targets, *, tile_hw=None):
    """inputs: (N, C, H, W) float logits; targets: (N, H, W) int class ids.
    Returns scalar mean cross-entropy loss (matches nn.CrossEntropyLoss)."""
    N, C, H, W = inputs.shape
    HW = H * W
    rows = N * HW

    # free reshapes of NCHW (no transpose, no pad)
    logits = inputs.reshape(N, C, HW)
    tgt = targets.reshape(N, 1, HW).astype(jnp.int32)

    if tile_hw is None:
        tile_hw = _pick_tile_hw(C, HW, jnp.dtype(inputs.dtype).itemsize)
    num_t = pl.cdiv(HW, tile_hw)

    kernel = functools.partial(_ce_kernel, hw=HW, tile_hw=tile_hw)

    partials = pl.pallas_call(
        kernel,
        out_shape=jax.ShapeDtypeStruct((N, 1, 1), jnp.float32),
        grid_spec=pltpu.PrefetchScalarGridSpec(
            num_scalar_prefetch=0,
            grid=(N, num_t),
            in_specs=[
                pl.BlockSpec((None, C, tile_hw), lambda n, t: (n, 0, t)),
                pl.BlockSpec((None, 1, tile_hw), lambda n, t: (n, 0, t)),
            ],
            out_specs=pl.BlockSpec((None, 1, 1), lambda n, t: (n, 0, 0)),
            scratch_shapes=[
                pltpu.VMEM((1, tile_hw), jnp.float32),   # per-column loss accumulator
                pltpu.VMEM((C, tile_hw), jnp.int32),     # hoisted class-id iota
            ],
        ),
        compiler_params=pltpu.CompilerParams(
            dimension_semantics=("parallel", "arbitrary")),
    )(logits, tgt)

    # reduction='mean' over all pixels (no ignore_index in the reference module)
    return jnp.sum(partials) * (1.0 / float(rows))


def _reference(inputs, targets):
    # pure-JAX reference: mean over all pixels of -log_softmax[target]
    N, C, H, W = inputs.shape
    logits = jnp.transpose(inputs, (0, 2, 3, 1)).reshape(-1, C).astype(jnp.float32)
    tgt = targets.reshape(-1).astype(jnp.int32)
    logp = jax.nn.log_softmax(logits, axis=-1)
    return -jnp.mean(jnp.take_along_axis(logp, tgt[:, None], axis=1))


if __name__ == "__main__":
    key = jax.random.PRNGKey(0)
    k1, k2 = jax.random.split(key)

    N, C, H, W = 2, 4, 16, 16
    inputs = jax.random.normal(k1, (N, C, H, W), dtype=jnp.float32)
    targets = jax.random.randint(k2, (N, H, W), 0, C, dtype=jnp.int32)

    loss = cross_entropy_loss_2d(inputs, targets)
    loss = jax.block_until_ready(loss)

    ref = _reference(inputs, targets)
    assert jnp.allclose(loss, ref, atol=1e-5, rtol=1e-5), (loss, ref)

    print("KERNEL_OK")
</pallas_src>

<mosaic_0001>
module attributes {stable_mosaic.version = 11 : i64} {
  func.func @_ce_kernel(%arg0: i32, %arg1: i32, %arg2: memref<1x4x256xf32, #tpu.memory_space<vmem>>, %arg3: memref<1x1x256xi32, #tpu.memory_space<vmem>>, %arg4: memref<1x1x1xf32, #tpu.memory_space<vmem>>, %arg5: memref<1x256xf32, #tpu.memory_space<vmem>>, %arg6: memref<4x256xi32, #tpu.memory_space<vmem>>) attributes {dimension_semantics = [#tpu.dimension_semantics<parallel>, #tpu.dimension_semantics<arbitrary>], iteration_bounds = array<i64: 2, 1>, scalar_prefetch = 0 : i64, scratch_operands = 2 : i64, tpu.core_type = #tpu.core_type<tc>, window_params = [{transform_indices = @transform_0, window_bounds = array<i64: 1, 4, 256>}, {transform_indices = @transform_1, window_bounds = array<i64: 1, 1, 256>}, {transform_indices = @transform_2, window_bounds = array<i64: 1, 1, 1>}]} {
    %c0_i32 = arith.constant 0 : i32
    %0 = arith.cmpi eq, %arg1, %c0_i32 : i32
    %1 = arith.extui %0 : i1 to i32
    %c0_i32_0 = arith.constant 0 : i32
    %2 = arith.cmpi ne, %1, %c0_i32_0 : i32
    scf.if %2 {
      %cst_20 = arith.constant 0.000000e+00 : f32
      %41 = vector.broadcast %cst_20 : f32 to vector<1x256xf32>
      %c0_21 = arith.constant 0 : index
      %c0_22 = arith.constant 0 : index
      %42 = vector.load %arg5[%c0_21, %c0_22] : memref<1x256xf32, #tpu.memory_space<vmem>>, vector<1x256xf32>
      tpu.vector_store %arg5[%c0_21, %c0_22], %41 {strides = array<i32>} : memref<1x256xf32, #tpu.memory_space<vmem>>, vector<1x256xf32>,
      %43 = tpu.iota {dimensions = array<i32: 0>} : vector<4x256xi32>
      %c0_23 = arith.constant 0 : index
      %c0_24 = arith.constant 0 : index
      %44 = vector.load %arg6[%c0_23, %c0_24] : memref<4x256xi32, #tpu.memory_space<vmem>>, vector<4x256xi32>
      tpu.vector_store %arg6[%c0_23, %c0_24], %43 {strides = array<i32>} : memref<4x256xi32, #tpu.memory_space<vmem>>, vector<4x256xi32>,
    } else {
    }
    %c0 = arith.constant 0 : index
    %c0_1 = arith.constant 0 : index
    %c0_2 = arith.constant 0 : index
    %3 = vector.load %arg2[%c0, %c0_1, %c0_2] : memref<1x4x256xf32, #tpu.memory_space<vmem>>, vector<1x4x256xf32>
    %4 = vector.shape_cast %3 : vector<1x4x256xf32> to vector<4x256xf32>
    %c0_3 = arith.constant 0 : index
    %c0_4 = arith.constant 0 : index
    %c0_5 = arith.constant 0 : index
    %5 = vector.load %arg3[%c0_3, %c0_4, %c0_5] : memref<1x1x256xi32, #tpu.memory_space<vmem>>, vector<1x1x256xi32>
    %6 = vector.shape_cast %5 : vector<1x1x256xi32> to vector<1x256xi32>
    %cst = arith.constant dense<0xFF800000> : vector<256xf32>
    %7 = vector.multi_reduction <maximumf>, %4, %cst [0] : vector<4x256xf32> to vector<256xf32>
    %8 = vector.shape_cast %7 : vector<256xf32> to vector<1x256xf32>
    %9 = vector.broadcast %8 : vector<1x256xf32> to vector<4x256xf32>
    %10 = arith.subf %4, %9 : vector<4x256xf32>
    %11 = math.exp %10 : vector<4x256xf32>
    %cst_6 = arith.constant dense<0.000000e+00> : vector<256xf32>
    %12 = vector.multi_reduction <add>, %11, %cst_6 [0] : vector<4x256xf32> to vector<256xf32>
    %13 = vector.shape_cast %12 : vector<256xf32> to vector<1x256xf32>
    %14 = math.log %13 : vector<1x256xf32>
    %15 = arith.addf %14, %8 : vector<1x256xf32>
    %c0_7 = arith.constant 0 : index
    %c0_8 = arith.constant 0 : index
    %16 = vector.load %arg6[%c0_7, %c0_8] : memref<4x256xi32, #tpu.memory_space<vmem>>, vector<4x256xi32>
    %17 = vector.broadcast %6 : vector<1x256xi32> to vector<4x256xi32>
    %18 = arith.cmpi eq, %16, %17 : vector<4x256xi32>
    %cst_9 = arith.constant 0.000000e+00 : f32
    %19 = vector.broadcast %cst_9 : f32 to vector<4x256xf32>
    %20 = arith.select %18, %4, %19 : vector<4x256xi1>, vector<4x256xf32>
    %cst_10 = arith.constant dense<0.000000e+00> : vector<256xf32>
    %21 = vector.multi_reduction <add>, %20, %cst_10 [0] : vector<4x256xf32> to vector<256xf32>
    %22 = vector.shape_cast %21 : vector<256xf32> to vector<1x256xf32>
    %c256_i32 = arith.constant 256 : i32
    %23 = arith.muli %arg1, %c256_i32 : i32
    %24 = tpu.iota {dimensions = array<i32: 1>} : vector<1x256xi32>
    %25 = vector.broadcast %23 : i32 to vector<1x256xi32>
    %26 = arith.addi %25, %24 : vector<1x256xi32>
    %c256_i32_11 = arith.constant 256 : i32
    %27 = vector.broadcast %c256_i32_11 : i32 to vector<1x256xi32>
    %28 = arith.cmpi slt, %26, %27 : vector<1x256xi32>
    %c0_i32_12 = arith.constant 0 : i32
    %29 = vector.broadcast %c0_i32_12 : i32 to vector<1x256xi32>
    %30 = arith.cmpi sge, %6, %29 : vector<1x256xi32>
    %31 = arith.andi %28, %30 : vector<1x256xi1>
    %c0_13 = arith.constant 0 : index
    %c0_14 = arith.constant 0 : index
    %32 = vector.load %arg5[%c0_13, %c0_14] : memref<1x256xf32, #tpu.memory_space<vmem>>, vector<1x256xf32>
    %33 = arith.subf %15, %22 : vector<1x256xf32>
    %cst_15 = arith.constant 0.000000e+00 : f32
    %34 = vector.broadcast %cst_15 : f32 to vector<1x256xf32>
    %35 = arith.select %31, %33, %34 : vector<1x256xi1>, vector<1x256xf32>
    %36 = arith.addf %32, %35 : vector<1x256xf32>
    %c0_16 = arith.constant 0 : index
    %c0_17 = arith.constant 0 : index
    %37 = vector.load %arg5[%c0_16, %c0_17] : memref<1x256xf32, #tpu.memory_space<vmem>>, vector<1x256xf32>
    tpu.vector_store %arg5[%c0_16, %c0_17], %36 {strides = array<i32>} : memref<1x256xf32, #tpu.memory_space<vmem>>, vector<1x256xf32>,
    %c0_i32_18 = arith.constant 0 : i32
    %38 = arith.cmpi eq, %arg1, %c0_i32_18 : i32
    %39 = arith.extui %38 : i1 to i32
    %c0_i32_19 = arith.constant 0 : i32
    %40 = arith.cmpi ne, %39, %c0_i32_19 : i32
    scf.if %40 {
      %c0_20 = arith.constant 0 : index
      %c0_21 = arith.constant 0 : index
      %41 = vector.load %arg5[%c0_20, %c0_21] : memref<1x256xf32, #tpu.memory_space<vmem>>, vector<1x256xf32>
      %42 = vector.shape_cast %41 : vector<1x256xf32> to vector<1x1x256xf32>
      %cst_22 = arith.constant dense<0.000000e+00> : vector<1xf32>
      %43 = vector.multi_reduction <add>, %42, %cst_22 [1, 2] : vector<1x1x256xf32> to vector<1xf32>
      %44 = vector.shape_cast %43 : vector<1xf32> to vector<1x1x1xf32>
      %45 = vector.extract %44[0, 0, 0] : f32 from vector<1x1x1xf32>
      %46 = vector.broadcast %45 : f32 to vector<1x1xf32>
      %c0_23 = arith.constant 0 : index
      %c0_24 = arith.constant 0 : index
      %c0_25 = arith.constant 0 : index
      %47 = vector.load %arg4[%c0_23, %c0_24, %c0_25] : memref<1x1x1xf32, #tpu.memory_space<vmem>>, vector<1x1x1xf32>
      %48 = vector.shape_cast %47 : vector<1x1x1xf32> to vector<1x1xf32>
      %49 = vector.shape_cast %46 : vector<1x1xf32> to vector<1x1x1xf32>
      tpu.vector_store %arg4[%c0_23, %c0_24, %c0_25], %49 {strides = array<i32>} : memref<1x1x1xf32, #tpu.memory_space<vmem>>, vector<1x1x1xf32>,
    } else {
    }
    return
  }
  func.func @transform_0(%arg0: i32, %arg1: i32) -> (i32, i32, i32) {
    %c0_i32 = arith.constant 0 : i32
    %c0_i32_0 = arith.constant 0 : i32
    return %arg0, %c0_i32, %arg1 : i32, i32, i32
  }
  func.func @transform_1(%arg0: i32, %arg1: i32) -> (i32, i32, i32) {
    %c0_i32 = arith.constant 0 : i32
    %c0_i32_0 = arith.constant 0 : i32
    return %arg0, %c0_i32, %arg1 : i32, i32, i32
  }
  func.func @transform_2(%arg0: i32, %arg1: i32) -> (i32, i32, i32) {
    %c0_i32 = arith.constant 0 : i32
    %c0_i32_0 = arith.constant 0 : i32
    %c0_i32_1 = arith.constant 0 : i32
    return %arg0, %c0_i32, %c0_i32_0 : i32, i32, i32
  }
}

</mosaic_0001>

<llo_original>
// kernel: tpu_custom_call.1
$region0: #{tpu_custom_call.1}
  #allocation0 [shape = 'u32[]', space=smem, size = 0x4, offset = 0x4, fixed_abs, tag = 'smem constant byte address 0x4 - core index']
  #allocation1 [shape = 'u32[144,128]{1,0:T(1,128)}', space=vmem, size = 0x12000, scoped, tag = 'internal scratch']
  #allocation2 [shape = 'f32[1,256]{1,0:T(1,128)}', space=vmem, size = 0x400, scoped, tag = 'scratch operand']
  #allocation3 [shape = 's32[4,256]{1,0:T(4,128)}', space=vmem, size = 0x1000, scoped, tag = 'scratch operand']
  %s0 = inlined_call_operand.hbm [shape: f32[2,4,256], index: 0, kind: input, shape index: {}]
  %s1 = inlined_call_operand.hbm [shape: s32[2,1,256], index: 1, kind: input, shape index: {}]
  %s2 = inlined_call_operand.vmem [shape: f32[2,1,1], index: 2, kind: output, shape index: {}]
  %s3 = sld [smem:[#allocation0]]
  $region57: #{tpu_custom_call.1} parent=0
    _
  %s5 = ssub.s32 1, %s3
  %s6 = scalar_select 0, %s5, %s3
  $region1: #{tpu_custom_call.1} parent=0
    #allocation4 [shape = 'u8[8192]{0}', space=vmem, size = 0x2000, scoped, tag = 'input window, operand 0']
    #allocation5 [shape = 's32[2]{0}', space=sflag, size = 0x8, scoped, tag = 'scoped memory for tpu_custom_call.1']
    #allocation6 [shape = 'u8[2048]{0}', space=vmem, size = 0x800, scoped, tag = 'input window, operand 1']
    #allocation7 [shape = 's32[2]{0}', space=sflag, size = 0x8, scoped, tag = 'scoped memory for tpu_custom_call.1']
    %7 = vsyncpa [#allocation5], 0
    %s8 = scalar_lea.sflag [#allocation5], 1
    %9 = vsyncpa %s8, 0
    %10 = vsyncpa [#allocation7], 0
    %s11 = scalar_lea.sflag [#allocation7], 1
    %12 = vsyncpa %s11, 0
    loop: start=0, step=1, limit=4
    $region2: #{tpu_custom_call.1} parent=1 // loop_pre_header
      _
    $region3: #{tpu_custom_call.1} parent=1 // loop_header
      %s14 = sphi 0, %s18
      %p15 = scmp.ge.s32.totalorder %s14, 4
      %s21 = sphi 0, %s33
      %s22 = sphi 0, %s29
      %s23 = sphi 0, %s21
      %s24 = sphi 0, %s22
      %s25 = sphi 0, %s23
      %s26 = sphi 0, %s24
      %s38 = sphi 0, %s40
      %s41 = sphi 0, %s38
      %s42 = sphi 0, %s41
      %s58 = sphi 0, %s42
      %s66 = sphi 0, %s68
      %s69 = sphi 0, %s66
      %s70 = sphi 0, %s69
      %s86 = sphi 0, %s70
      %s92 = sphi 0, %s94
      %s95 = sphi 0, %s92
      %s96 = sphi 0, %s95
      %s112 = sphi 0, %s96
    $region4: #{tpu_custom_call.1} parent=1 // loop_header_branch
      %17 = sbr.rel (%p15) target = $region8
    $region5: #{tpu_custom_call.1} parent=1 // loop_body
      %s19 = ssub.s32 %s14, 1
      %s20 = ssub.s32 %s14, 2
      %s27 = sadd.s32 1, %s22
      %p28 = scmp.ge.s32.totalorder %s27, 1
      %s29 = scalar_select %p28, 0, %s27
      %s30 = sadd.s32 1, %s21
      %s31 = scalar_select %p28, %s30, %s21
      %p32 = scmp.ge.s32.totalorder %s31, 2
      %s33 = scalar_select %p32, 0, %s31
      %s34 = ssub.s32 %s21, %s33
      %s35 = ssub.s32 %s22, %s29
      %s36 = sor.u32 %s34, %s35
      %p37 = scmp.eq.s32.totalorder %s36, 0
      %s39 = sadd.s32 %s38, 1
      %s40 = scalar_select %p37, %s38, %s39
      %p43 = pneg %p37
      %p44 = scmp.eq.s32.totalorder %s14, 1
      %p45 = por %p43, %p44
      %p46 = scmp.ne.s32.totalorder %s38, %s41
      %p47 = scmp.eq.s32.totalorder %s14, 0
      %p48 = por %p46, %p47
      %p49 = scmp.ne.s32.totalorder %s38, %s41
      %p50 = scmp.eq.s32.totalorder %s19, 1
      %p51 = por %p49, %p50
      %p52 = scmp.ne.s32.totalorder %s41, %s42
      %p53 = scmp.eq.s32.totalorder %s19, 0
      %p54 = por %p52, %p53
      %p55 = scmp.ne.s32.totalorder %s41, %s42
      %p56 = scmp.eq.s32.totalorder %s20, 1
      %p57 = por %p55, %p56
      %p59 = scmp.ne.s32.totalorder %s42, %s58
      %p60 = scmp.eq.s32.totalorder %s20, 0
      %p61 = por %p59, %p60
      %s62 = ssub.s32 %s21, %s33
      %s63 = ssub.s32 %s22, %s29
      %s64 = sor.u32 %s62, %s63
      %p65 = scmp.eq.s32.totalorder %s64, 0
      %s67 = sadd.s32 %s66, 1
      %s68 = scalar_select %p65, %s66, %s67
      %p71 = pneg %p65
      %p72 = scmp.eq.s32.totalorder %s14, 1
      %p73 = por %p71, %p72
      %p74 = scmp.ne.s32.totalorder %s66, %s69
      %p75 = scmp.eq.s32.totalorder %s14, 0
      %p76 = por %p74, %p75
      %p77 = scmp.ne.s32.totalorder %s66, %s69
      %p78 = scmp.eq.s32.totalorder %s19, 1
      %p79 = por %p77, %p78
      %p80 = scmp.ne.s32.totalorder %s69, %s70
      %p81 = scmp.eq.s32.totalorder %s19, 0
      %p82 = por %p80, %p81
      %p83 = scmp.ne.s32.totalorder %s69, %s70
      %p84 = scmp.eq.s32.totalorder %s20, 1
      %p85 = por %p83, %p84
      %p87 = scmp.ne.s32.totalorder %s70, %s86
      %p88 = scmp.eq.s32.totalorder %s20, 0
      %p89 = por %p87, %p88
      %s90 = ssub.s32 %s21, %s33
      %p91 = scmp.eq.s32.totalorder %s90, 0
      %s93 = sadd.s32 %s92, 1
      %s94 = scalar_select %p91, %s92, %s93
      %p97 = pneg %p91
      %p98 = scmp.eq.s32.totalorder %s14, 1
      %p99 = por %p97, %p98
      %p100 = scmp.ne.s32.totalorder %s92, %s95
      %p101 = scmp.eq.s32.totalorder %s14, 0
      %p102 = por %p100, %p101
      %p103 = scmp.ne.s32.totalorder %s92, %s95
      %p104 = scmp.eq.s32.totalorder %s19, 1
      %p105 = por %p103, %p104
      %p106 = scmp.ne.s32.totalorder %s95, %s96
      %p107 = scmp.eq.s32.totalorder %s19, 0
      %p108 = por %p106, %p107
      %p109 = scmp.ne.s32.totalorder %s95, %s96
      %p110 = scmp.eq.s32.totalorder %s20, 1
      %p111 = por %p109, %p110
      %p113 = scmp.ne.s32.totalorder %s96, %s112
      %p114 = scmp.eq.s32.totalorder %s20, 0
      %p115 = por %p113, %p114
      %p116 = scmp.le.s32.totalorder 1, %s14
      %p117 = scmp.lt.s32.totalorder %s14, 3
      %p118 = pnand %p116, %p117
      %p119 = pneg %p118
      // Predicated region
      $region9: #{tpu_custom_call.1} parent=5 // pred_check
        _
      $region10: #{tpu_custom_call.1} parent=5 // pred_check_branch
        %121 = sbr.rel (%p118) target = $region12
      $region11: #{tpu_custom_call.1} parent=5 // pred_region
        %s122 = ssub.s32 %s14, 1
      $region12: #{tpu_custom_call.1} parent=5 // pred_fallthru
        _
      %p123 = scmp.lt.s32.totalorder %s14, 2
      // Predicated region
      $region13: #{tpu_custom_call.1} parent=5 // pred_check
        %p124 = pneg %p123
      $region14: #{tpu_custom_call.1} parent=5 // pred_check_branch
        %126 = sbr.rel (%p124) target = $region16
      $region15: #{tpu_custom_call.1} parent=5 // pred_region
        // Predicated region
        $region17: #{tpu_custom_call.1} parent=15 // pred_check
          %p127 = pneg %p48
        $region18: #{tpu_custom_call.1} parent=15 // pred_check_branch
          %129 = sbr.rel (%p127) target = $region20
        $region19: #{tpu_custom_call.1} parent=15 // pred_region
          %s130 = sand.u32 %s38, 1
          %s131 = scalar_lea.sflag [#allocation5], %s130
          %s132 = sand.u32 %s38, 1
          %s133 = smul.addr %s132, 8
          %s134 = scalar_lea.vmem [#allocation4], %s133
          %s135 = smul.u32 2, %s22
          %s137 = ssub.s32 128, 128
          %138 = vsyncadd %s131, %s137
          %s139 = smul.addr %s21, 2
          %s140 = sadd.s32 %s135, %s139
          %s141 = smul.addr %s140, 64
          %s142 = scalar_lea.hbm %s0, %s141
          %s144 = sshll.u32 %s134, 4
          %s145 = int_to_ptr.vmem [resolvable:$true] %s144
          %147 = dma.hbm_to_vmem [thread:$0]  %s142, 128, %s145, %s131
        $region20: #{tpu_custom_call.1} parent=15 // pred_fallthru
          _
        // Predicated region
        $region21: #{tpu_custom_call.1} parent=15 // pred_check
          %p148 = pneg %p76
        $region22: #{tpu_custom_call.1} parent=15 // pred_check_branch
          %150 = sbr.rel (%p148) target = $region24
        $region23: #{tpu_custom_call.1} parent=15 // pred_region
          %s151 = sand.u32 %s66, 1
          %s152 = scalar_lea.sflag [#allocation7], %s151
          %s153 = sand.u32 %s66, 1
          %s154 = smul.addr %s153, 2
          %s155 = scalar_lea.vmem [#allocation6], %s154
          %s156 = smul.u32 2, %s22
          %s158 = ssub.s32 32, 32
          %159 = vsyncadd %s152, %s158
          %s160 = smul.addr %s21, 2
          %s161 = sadd.s32 %s156, %s160
          %s162 = smul.addr %s161, 16
          %s163 = scalar_lea.hbm %s1, %s162
          %s165 = sshll.u32 %s155, 4
          %s166 = int_to_ptr.vmem [resolvable:$true] %s165
          %168 = dma.hbm_to_vmem [thread:$0]  %s163, 32, %s166, %s152
        $region24: #{tpu_custom_call.1} parent=15 // pred_fallthru
          _
      $region16: #{tpu_custom_call.1} parent=5 // pred_fallthru
        _
      %p169 = scmp.le.s32.totalorder 1, %s14
      %p170 = scmp.lt.s32.totalorder %s14, 3
      %p171 = pnand %p169, %p170
      %p172 = pneg %p171
      // Predicated region
      $region25: #{tpu_custom_call.1} parent=5 // pred_check
        _
      $region26: #{tpu_custom_call.1} parent=5 // pred_check_branch
        %174 = sbr.rel (%p171) target = $region28
      $region27: #{tpu_custom_call.1} parent=5 // pred_region
        %s175 = ssub.s32 %s14, 1
        %s176 = sand.u32 %s41, 1
        %s177 = scalar_lea.sflag [#allocation5], %s176
        %s178 = sand.u32 %s41, 1
        %s179 = smul.addr %s178, 8
        %s180 = scalar_lea.vmem [#allocation4], %s179
        // Predicated region
        $region29: #{tpu_custom_call.1} parent=27 // pred_check
          %p181 = pneg %p54
        $region30: #{tpu_custom_call.1} parent=27 // pred_check_branch
          %183 = sbr.rel (%p181) target = $region32
        $region31: #{tpu_custom_call.1} parent=27 // pred_region
          %184 = dma.done %s177, 128
        $region32: #{tpu_custom_call.1} parent=27 // pred_fallthru
          _
        %s185 = sand.u32 %s69, 1
        %s186 = scalar_lea.sflag [#allocation7], %s185
        %s187 = sand.u32 %s69, 1
        %s188 = smul.addr %s187, 2
        %s189 = scalar_lea.vmem [#allocation6], %s188
        // Predicated region
        $region33: #{tpu_custom_call.1} parent=27 // pred_check
          %p190 = pneg %p82
        $region34: #{tpu_custom_call.1} parent=27 // pred_check_branch
          %192 = sbr.rel (%p190) target = $region36
        $region35: #{tpu_custom_call.1} parent=27 // pred_region
          %193 = dma.done %s186, 32
        $region36: #{tpu_custom_call.1} parent=27 // pred_fallthru
          _
        %s194 = sand.u32 %s41, 1
        %s195 = scalar_lea.sflag [#allocation5], %s194
        %s196 = sand.u32 %s41, 1
        %s197 = smul.addr %s196, 8
        %s198 = scalar_lea.vmem [#allocation4], %s197
        %p199 = pneg %p54
        %p200 = pneg %p51
        %s201 = sand.u32 %s69, 1
        %s202 = scalar_lea.sflag [#allocation7], %s201
        %s203 = sand.u32 %s69, 1
        %s204 = smul.addr %s203, 2
        %s205 = scalar_lea.vmem [#allocation6], %s204
        %p206 = pneg %p82
        %p207 = pneg %p79
        %p208 = pneg %p108
        %p209 = pneg %p105
        %p210 = scmp.lt.s32.totalorder %s23, 1
        %s211 = scalar_select %p210, %s23, 1
        %s212 = scalar_lea.vmem %s2, %s211
        %s213 = smul.u32 2, %s24
        %s214 = smul.u32 2, %s24
        %p215 = scmp.lt.s32.totalorder %s23, 1
        %s216 = scalar_select %p215, %s23, 1
        %s217 = scalar_lea.vmem %s2, %s216
        %p218 = scmp.eq.s32.totalorder %s24, 0
        // Predicated region
        $region37: #{tpu_custom_call.1} parent=27 // pred_check
          %p219 = pneg %p218
        $region38: #{tpu_custom_call.1} parent=27 // pred_check_branch
          %221 = sbr.rel (%p219) target = $region40
        $region39: #{tpu_custom_call.1} parent=27 // pred_region
          %v222 = vlaneseq
          %vm223 = vcmp.ge.s32.totalorder %v222, 0
          %vm224 = vcmp.lt.s32.totalorder %v222, 256
          %vm225 = vmand %vm223, %vm224
          %226 = vst.msk [vmem:[#allocation2] sm:$0x3] %vm225, 0.0
          %v227 = vlaneseq
          %v228 = vshrl.u32 %v227, 7
          %v230 = vunpack.c.l.s4 839922192
          %v231 = vunpack.c.0.s8 %v230
          %v232 = vlaneseq
          %v233 = vshrl.u32 %v232, 7
          %v234 = vsub.s32 %v231, %v233
          %v235 = vrot.slane %v228, %v234
          %236 = vst [vmem:[#allocation3] sm:$0xff] %v235
        $region40: #{tpu_custom_call.1} parent=27 // pred_fallthru
          _
        %v237 = vld [vmem:[%s180] sm:$0xff]
        %v238 = vld [vmem:[%s189] sm:$0x3]
        %v240 = vcombine.high %v237, %v237
        %vm242 = vcmask 1043456
        %v243 = vsel %vm242, %v237, -inf
        %v244 = vrot.slane %v243, 4
        %v245 = vmax.f32 %v243, %v244
        %v246 = vrot.slane %v245, 2
        %v247 = vmax.f32 %v245, %v246
        %v248 = vrot.slane %v247, 1
        %v249 = vmax.f32 %v247, %v248
        %v250 = vsel %vm242, %v240, -inf
        %v251 = vrot.slane %v250, 4
        %v252 = vmax.f32 %v250, %v251
        %v253 = vrot.slane %v252, 2
        %v254 = vmax.f32 %v252, %v253
        %v255 = vrot.slane %v254, 1
        %v256 = vmax.f32 %v254, %v255
        %v259 = vcombine.low %v249, %v256
        %v261 = vsub.f32 %v237, %v259
        %v262 = vmul.f32 %v261, 1.442695
        %v263 = vpow.pop %v262
        %v265 = vcombine.high %v263, %v263
        %v267 = vsel %vm242, %v263, 0.0
        %v268 = vrot.slane %v267, 4
        %v269 = vadd.f32 %v267, %v268
        %v270 = vrot.slane %v269, 2
        %v271 = vadd.f32 %v269, %v270
        %v272 = vrot.slane %v271, 1
        %v273 = vadd.f32 %v271, %v272
        %v274 = vsel %vm242, %v265, 0.0
        %v275 = vrot.slane %v274, 4
        %v276 = vadd.f32 %v274, %v275
        %v277 = vrot.slane %v276, 2
        %v278 = vadd.f32 %v276, %v277
        %v279 = vrot.slane %v278, 1
        %v280 = vadd.f32 %v278, %v279
        %v281 = vlog2.pop %v273
        %v282 = vmul.f32 %v281, 0.6931472
        %v283 = vlog2.pop %v280
        %v284 = vmul.f32 %v283, 0.6931472
        %v285 = vadd.f32 %v282, %v249
        %v286 = vadd.f32 %v284, %v256
        %v287 = vld [vmem:[#allocation3] sm:$0xff]
        %v288 = vlaneseq
        %v289 = vshrl.u32 %v288, 7
        %v290 = vsub.s32 0, %v289
        %v291 = vrot.slane %v238, %v290
        %v292 = vlaneseq
        %v293 = vshrl.u32 %v292, 7
        %v294 = vsub.s32 1, %v293
        %v295 = vrot.slane %v238, %v294
        %v296 = vcombine.low %v291, %v295
        %vm297 = vcmp.eq.s32.totalorder %v287, %v296
        %v298 = vsel %vm297, %v237, 0.0
        %v300 = vcombine.high %v298, %v298
        %v302 = vsel %vm242, %v298, 0.0
        %v303 = vrot.slane %v302, 4
        %v304 = vadd.f32 %v302, %v303
        %v305 = vrot.slane %v304, 2
        %v306 = vadd.f32 %v304, %v305
        %v307 = vrot.slane %v306, 1
        %v308 = vadd.f32 %v306, %v307
        %v309 = vsel %vm242, %v300, 0.0
        %v310 = vrot.slane %v309, 4
        %v311 = vadd.f32 %v309, %v310
        %v312 = vrot.slane %v311, 2
        %v313 = vadd.f32 %v311, %v312
        %v314 = vrot.slane %v313, 1
        %v315 = vadd.f32 %v313, %v314
        %s316 = smul.u32 %s24, 256
        %v317 = vlaneseq
        %v318 = vand.u32 %v317, 127
        %v319 = vadd.s32 %v318, 128
        %v320 = vstv %s316
        %v321 = vadd.s32 %v320, %v318
        %v322 = vadd.s32 %v320, %v319
        %vm323 = vcmp.lt.s32.totalorder %v321, 256
        %vm324 = vcmp.lt.s32.totalorder %v322, 256
        %vm325 = vcmp.ge.s32.totalorder %v238, 0
        %v326 = vsel %vm325, 1, 0
        %v327 = vlaneseq
        %v328 = vshrl.u32 %v327, 7
        %v329 = vsub.s32 0, %v328
        %v330 = vrot.slane %v326, %v329
        %v331 = vlaneseq
        %v332 = vshrl.u32 %v331, 7
        %v333 = vsub.s32 1, %v332
        %v334 = vrot.slane %v326, %v333
        %vm335 = vcmp.ne.s32.totalorder %v330, 0
        %vm336 = vcmp.ne.s32.totalorder %v334, 0
        %vm337 = vmand %vm323, %vm335
        %vm338 = vmand %vm324, %vm336
        %v339 = vld [vmem:[#allocation2] sm:$0x3]
        %v340 = vsub.f32 %v285, %v308
        %v341 = vsub.f32 %v286, %v315
        %v342 = vsel %vm337, %v340, 0.0
        %v343 = vsel %vm338, %v341, 0.0
        %v346 = vcombine.low %v342, %v343
        %v348 = vunpack.c.l.s4 1966171168
        %v349 = vunpack.c.0.s8 %v348
        %v350 = vlaneseq
        %v351 = vshrl.u32 %v350, 7
        %v352 = vsub.s32 %v349, %v351
        %v353 = vrot.slane %v346, %v352
        %v355 = vunpack.c.l.s4 1966171168
        %v356 = vunpack.c.0.s8 %v355
        %v357 = vlaneseq
        %v358 = vshrl.u32 %v357, 7
        %v359 = vsub.s32 %v356, %v358
        %v360 = vrot.slane %v353, %v359
        %v362 = vadd.f32 %v339, %v360
        %v363 = vlaneseq
        %vm364 = vcmp.ge.s32.totalorder %v363, 0
        %vm365 = vcmp.lt.s32.totalorder %v363, 256
        %vm366 = vmand %vm364, %vm365
        %367 = vst.msk [vmem:[#allocation2] sm:$0x3] %vm366, %v362
        // Predicated region
        $region41: #{tpu_custom_call.1} parent=27 // pred_check
          %p368 = pneg %p218
        $region42: #{tpu_custom_call.1} parent=27 // pred_check_branch
          %370 = sbr.rel (%p368) target = $region44
        $region43: #{tpu_custom_call.1} parent=27 // pred_region
          %v371 = vld [vmem:[#allocation2] sm:$0x3]
          %v373 = vlaneseq
          %v374 = vshrl.u32 %v373, 7
          %v375 = vsub.s32 0, %v374
          %v376 = vrot.slane %v371, %v375
          %v377 = vlaneseq
          %v378 = vshrl.u32 %v377, 7
          %v379 = vsub.s32 1, %v378
          %v380 = vrot.slane %v371, %v379
          %vm383 = vcmask 1040384
          %v384 = vsel %vm383, %v376, 0.0
          %v385 = vsel %vm383, %v380, 0.0
          %v386 = vadd.f32 %v384, %v385
          %387 = vadd.xlane.f32.xlu0 %v386
          %v388 = vpop.xlane.xlu0 %387
          %v389 = vrot.slane %v388, 4
          %v390 = vadd.f32 %v388, %v389
          %v391 = vrot.slane %v390, 2
          %v392 = vadd.f32 %v390, %v391
          %v393 = vrot.slane %v392, 1
          %v394 = vadd.f32 %v392, %v393
          %s395 = vtos %v394
          %v396 = vstv %s395
          %vm397 = vcmask 0
          %398 = vst.msk [vmem:[%s217] sm:$0x1] %vm397, %v396
        $region44: #{tpu_custom_call.1} parent=27 // pred_fallthru
          _
        %p399 = scmp.lt.s32.totalorder %s23, 1
        %s400 = scalar_select %p399, %s23, 1
        %s401 = scalar_lea.vmem %s2, %s400
        // Predicated region
        $region45: #{tpu_custom_call.1} parent=27 // pred_check
          %p402 = pneg %p105
        $region46: #{tpu_custom_call.1} parent=27 // pred_check_branch
          %404 = sbr.rel (%p402) target = $region48
        $region47: #{tpu_custom_call.1} parent=27 // pred_region
          _
        $region48: #{tpu_custom_call.1} parent=27 // pred_fallthru
          _
      $region28: #{tpu_custom_call.1} parent=5 // pred_fallthru
        _
      %p405 = scmp.le.s32.totalorder 2, %s14
      // Predicated region
      $region49: #{tpu_custom_call.1} parent=5 // pred_check
        %p406 = pneg %p405
      $region50: #{tpu_custom_call.1} parent=5 // pred_check_branch
        %408 = sbr.rel (%p406) target = $region52
      $region51: #{tpu_custom_call.1} parent=5 // pred_region
        %s409 = ssub.s32 %s14, 2
        // Predicated region
        $region53: #{tpu_custom_call.1} parent=51 // pred_check
          %p410 = pneg %p111
        $region54: #{tpu_custom_call.1} parent=51 // pred_check_branch
          %412 = sbr.rel (%p410) target = $region56
        $region55: #{tpu_custom_call.1} parent=51 // pred_region
          %p413 = scmp.lt.s32.totalorder %s25, 1
          %s414 = scalar_select %p413, %s25, 1
          %s415 = scalar_lea.vmem %s2, %s414
        $region56: #{tpu_custom_call.1} parent=51 // pred_fallthru
          _
      $region52: #{tpu_custom_call.1} parent=5 // pred_fallthru
        _
    $region6: #{tpu_custom_call.1} parent=1 // loop_footer
      %s18 = sadd.s32 1, %s14
    $region7: #{tpu_custom_call.1} parent=1 // loop_footer_branch
      %13 = sbr.rel target = $region3
    $region8: #{tpu_custom_call.1} parent=1 // loop_exit
      _
    %416 = vsyncpa [#allocation5], 1
    %s417 = scalar_lea.sflag [#allocation5], 1
    %418 = vsyncpa %s417, 1
    %419 = vsyncpa [#allocation7], 1
    %s420 = scalar_lea.sflag [#allocation7], 1
    %421 = vsyncpa %s420, 1

</llo_original>
